<compile_context>
chip_gen: v7x
topology: tpu7x:2x2x1
jax: 0.10.0
libtpu: 0.0.40
codegen_flags: <defaults>
</compile_context>

<pallas_src>
import functools

import jax
import jax.numpy as jnp
from jax.experimental import pallas as pl
from jax.experimental.pallas import tpu as pltpu

_LANES = 128
_SUBLANES = 8

# Scoped-VMEM request: safe on every generation (v7x physical VMEM is 64 MiB).
_VMEM_LIMIT_BYTES = 32 * 1024 * 1024
# Tile budget (double-buffered in/out tiles + activation scratch) kept well
# below the limit above.
_VMEM_TILE_BUDGET = 16 * 1024 * 1024


def _mlp_kernel(x_ref, w1_ref, b1_ref, w2_ref, b2_ref, w3_ref, b3_ref, o_ref,
                *, first_layer_on_vpu):
    # x_ref: (TN, IN), wK_ref: (., W), bK_ref: (1, W), o_ref: (TN, W)
    x = x_ref[...].astype(jnp.float32)

    if first_layer_on_vpu:
        # Unpacked fallback with in_features == 1: a K=1 MXU matmul is a
        # degenerate push, so do a VPU broadcast multiply-add instead.
        h = x * w1_ref[...] + b1_ref[...]
    else:
        h = jnp.dot(x, w1_ref[...], preferred_element_type=jnp.float32) + b1_ref[...]
    h = jnp.maximum(h, 0.0)

    h = jnp.dot(h, w2_ref[...], preferred_element_type=jnp.float32) + b2_ref[...]
    h = jnp.maximum(h, 0.0)

    h = jnp.dot(h, w3_ref[...], preferred_element_type=jnp.float32) + b3_ref[...]
    h = jnp.maximum(h, 0.0)

    o_ref[...] = h.astype(o_ref.dtype)


def _block_diag(w, pack):
    """[f, d] -> block-diagonal [pack*f, pack*d] with `pack` copies of w."""
    f, d = w.shape
    out = jnp.zeros((pack * f, pack * d), w.dtype)
    for j in range(pack):
        out = out.at[j * f:(j + 1) * f, j * d:(j + 1) * d].set(w)
    return out


def _row_tile(n_rows, in_width, out_width, budget_bytes=_VMEM_TILE_BUDGET):
    """Pick a sublane-aligned packed-row tile that fits the VMEM budget."""
    # f32: double-buffered x/out tiles + ~2 live activation copies per row.
    per_row = 4 * (2 * in_width + 4 * out_width)
    bn = min(n_rows, max(_SUBLANES, budget_bytes // per_row))
    if bn >= n_rows and n_rows >= 4 * _SUBLANES:
        # Keep >= 2 grid steps on non-tiny inputs: overlaps DMA with compute
        # and lets the "parallel" axis feed both v7x TensorCores.
        bn = (n_rows + 1) // 2
    bn = max(_SUBLANES, (bn // _SUBLANES) * _SUBLANES)
    return min(bn, n_rows)


@functools.partial(jax.jit, static_argnames=("block_rows",))
def continuous_attribute_forward(x, params, block_rows=None):
    """Fused 3-layer MLP (Linear+ReLU x3) == ContinuousAttribute.forward.

    x:       [N, in_features] float32
    params:  dict of w1 [in, D], b1 [D], w2 [D, D], b2 [D], w3 [D, D], b3 [D]
             (weights stored [in, out], i.e. transposed vs. nn.Linear)
    returns: [N, D] float32
    """
    n, in_features = x.shape
    d = params["w1"].shape[1]

    # Lane-dense packing factor: fold `pack` logical rows into one 128-lane row.
    pack = _LANES // d if (d <= _LANES and _LANES % d == 0) else 1

    row_group = _SUBLANES * pack
    n_pad = ((n + row_group - 1) // row_group) * row_group
    if n_pad != n:
        x = jnp.pad(x, ((0, n_pad - n), (0, 0)))

    n_rows = n_pad // pack              # packed row count (multiple of 8)
    in_width = in_features * pack
    out_width = d * pack                # == 128 when packing is active
    xp = x.reshape(n_rows, in_width)    # free row-major repack

    if pack > 1:
        w1 = _block_diag(params["w1"], pack)
        w2 = _block_diag(params["w2"], pack)
        w3 = _block_diag(params["w3"], pack)
        b1 = jnp.tile(params["b1"], pack).reshape(1, out_width)
        b2 = jnp.tile(params["b2"], pack).reshape(1, out_width)
        b3 = jnp.tile(params["b3"], pack).reshape(1, out_width)
    else:
        w1, w2, w3 = params["w1"], params["w2"], params["w3"]
        b1 = params["b1"].reshape(1, d)
        b2 = params["b2"].reshape(1, d)
        b3 = params["b3"].reshape(1, d)

    if block_rows is None:
        block_rows = _row_tile(n_rows, in_width, out_width)
    grid = (pl.cdiv(n_rows, block_rows),)

    # Constant index_map -> weights/biases fetched once, resident across grid.
    weight_spec = lambda shape: pl.BlockSpec(shape, lambda i: (0, 0))

    kernel = functools.partial(
        _mlp_kernel, first_layer_on_vpu=(pack == 1 and in_features == 1))

    cost = pl.CostEstimate(
        flops=2 * n_rows * (in_width * out_width + 2 * out_width * out_width)
              + 6 * n_rows * out_width,
        transcendentals=0,
        bytes_accessed=4 * (n_rows * (in_width + out_width)
                            + in_width * out_width + 2 * out_width * out_width
                            + 3 * out_width),
    )

    out = pl.pallas_call(
        kernel,
        out_shape=jax.ShapeDtypeStruct((n_rows, out_width), x.dtype),
        grid_spec=pltpu.PrefetchScalarGridSpec(
            num_scalar_prefetch=0,
            grid=grid,
            in_specs=[
                pl.BlockSpec((block_rows, in_width), lambda i: (i, 0)),  # x tile
                weight_spec(w1.shape),        # w1
                weight_spec((1, out_width)),  # b1
                weight_spec(w2.shape),        # w2
                weight_spec((1, out_width)),  # b2
                weight_spec(w3.shape),        # w3
                weight_spec((1, out_width)),  # b3
            ],
            out_specs=pl.BlockSpec((block_rows, out_width), lambda i: (i, 0)),
        ),
        compiler_params=pltpu.CompilerParams(
            dimension_semantics=("parallel",),
            vmem_limit_bytes=_VMEM_LIMIT_BYTES,
        ),
        cost_estimate=cost,
    )(xp, w1, b1, w2, b2, w3, b3)

    out = out.reshape(n_pad, d)
    if n_pad != n:
        out = out[:n]
    return out


def init_params(key, in_features, attr_embedding_dim):
    """Deterministic synthetic init matching nn.Linear shapes.

    PyTorch nn.Linear stores weight as [out, in]; we keep the transposed
    [in, out] form so the kernel does x @ W + b (same math as x @ W_pt.T + b).
    """
    d = attr_embedding_dim
    k1, k2, k3, k4, k5, k6 = jax.random.split(key, 6)

    def linear_init(kw, kb, fan_in, fan_out):
        bound = 1.0 / jnp.sqrt(fan_in)
        w = jax.random.uniform(kw, (fan_in, fan_out), jnp.float32, -bound, bound)
        b = jax.random.uniform(kb, (fan_out,), jnp.float32, -bound, bound)
        return w, b

    w1, b1 = linear_init(k1, k2, in_features, d)   # LazyLinear(in_features -> D)
    w2, b2 = linear_init(k3, k4, d, d)             # Linear(D, D)
    w3, b3 = linear_init(k5, k6, d, d)             # Linear(D, D)
    return {"w1": w1, "b1": b1, "w2": w2, "b2": b2, "w3": w3, "b3": b3}


def _reference_forward(x, params):
    h = jnp.maximum(x @ params["w1"] + params["b1"], 0.0)
    h = jnp.maximum(h @ params["w2"] + params["b2"], 0.0)
    h = jnp.maximum(h @ params["w3"] + params["b3"], 0.0)
    return h


if __name__ == "__main__":
    key = jax.random.PRNGKey(0)
    k_x, k_p, k_x2 = jax.random.split(key, 3)

    # Small demo consistent with the module: a handful of attribute nodes,
    # each carrying a single continuous value, embedded to D=32.
    N = 8
    IN_FEATURES = 1
    ATTR_EMBEDDING_DIM = 32

    attribute_value = jax.random.normal(k_x, (N, IN_FEATURES), dtype=jnp.float32)
    params = init_params(k_p, IN_FEATURES, ATTR_EMBEDDING_DIM)

    out = continuous_attribute_forward(attribute_value, params)
    out = jax.block_until_ready(out)
    ref = _reference_forward(attribute_value, params)
    assert out.shape == (N, ATTR_EMBEDDING_DIM)
    assert jnp.allclose(out, ref, atol=1e-5, rtol=1e-5)

    # Second check: padded + multi-tile grid (exercises the lane-dense packed
    # path with a non-multiple-of-32 node count and a 2-step "parallel" grid).
    N2 = 1000
    x2 = jax.random.normal(k_x2, (N2, IN_FEATURES), dtype=jnp.float32)
    out2 = continuous_attribute_forward(x2, params)
    out2 = jax.block_until_ready(out2)
    ref2 = _reference_forward(x2, params)
    assert out2.shape == (N2, ATTR_EMBEDDING_DIM)
    assert jnp.allclose(out2, ref2, atol=1e-5, rtol=1e-5)

    print("KERNEL_OK")
</pallas_src>

<mosaic_0001>
module attributes {stable_mosaic.version = 11 : i64} {
  func.func @_mlp_kernel(%arg0: i32, %arg1: memref<8x4xf32, #tpu.memory_space<vmem>>, %arg2: memref<4x128xf32, #tpu.memory_space<vmem>>, %arg3: memref<1x128xf32, #tpu.memory_space<vmem>>, %arg4: memref<128x128xf32, #tpu.memory_space<vmem>>, %arg5: memref<1x128xf32, #tpu.memory_space<vmem>>, %arg6: memref<128x128xf32, #tpu.memory_space<vmem>>, %arg7: memref<1x128xf32, #tpu.memory_space<vmem>>, %arg8: memref<8x128xf32, #tpu.memory_space<vmem>>) attributes {dimension_semantics = [#tpu.dimension_semantics<parallel>], iteration_bounds = array<i64: 1>, scalar_prefetch = 0 : i64, scratch_operands = 0 : i64, tpu.core_type = #tpu.core_type<tc>, window_params = [{transform_indices = @transform_0, window_bounds = array<i64: 8, 4>}, {pipeline_mode = #tpu.pipeline_mode<synchronous>, transform_indices = @transform_1, window_bounds = array<i64: 4, 128>}, {pipeline_mode = #tpu.pipeline_mode<synchronous>, transform_indices = @transform_2, window_bounds = array<i64: 1, 128>}, {pipeline_mode = #tpu.pipeline_mode<synchronous>, transform_indices = @transform_3, window_bounds = array<i64: 128, 128>}, {pipeline_mode = #tpu.pipeline_mode<synchronous>, transform_indices = @transform_4, window_bounds = array<i64: 1, 128>}, {pipeline_mode = #tpu.pipeline_mode<synchronous>, transform_indices = @transform_5, window_bounds = array<i64: 128, 128>}, {pipeline_mode = #tpu.pipeline_mode<synchronous>, transform_indices = @transform_6, window_bounds = array<i64: 1, 128>}, {transform_indices = @transform_7, window_bounds = array<i64: 8, 128>}]} {
    %c0 = arith.constant 0 : index
    %c0_0 = arith.constant 0 : index
    %0 = vector.load %arg1[%c0, %c0_0] : memref<8x4xf32, #tpu.memory_space<vmem>>, vector<8x4xf32>
    %c0_1 = arith.constant 0 : index
    %c0_2 = arith.constant 0 : index
    %1 = vector.load %arg2[%c0_1, %c0_2] : memref<4x128xf32, #tpu.memory_space<vmem>>, vector<4x128xf32>
    %cst = arith.constant dense<0.000000e+00> : vector<8x128xf32>
    %2 = tpu.matmul %0, %1, %cst {dimension_numbers = #tpu.dot_dimension_numbers<[1], [0], [0], [1], [0, 0, 1, 1], [], []>} : vector<8x4xf32>, vector<4x128xf32>, vector<8x128xf32> -> vector<8x128xf32>
    %c0_3 = arith.constant 0 : index
    %c0_4 = arith.constant 0 : index
    %3 = vector.load %arg3[%c0_3, %c0_4] : memref<1x128xf32, #tpu.memory_space<vmem>>, vector<1x128xf32>
    %4 = vector.broadcast %3 : vector<1x128xf32> to vector<8x128xf32>
    %5 = arith.addf %2, %4 : vector<8x128xf32>
    %cst_5 = arith.constant 0.000000e+00 : f32
    %6 = vector.broadcast %cst_5 : f32 to vector<8x128xf32>
    %7 = arith.maximumf %5, %6 : vector<8x128xf32>
    %c0_6 = arith.constant 0 : index
    %c0_7 = arith.constant 0 : index
    %8 = vector.load %arg4[%c0_6, %c0_7] : memref<128x128xf32, #tpu.memory_space<vmem>>, vector<128x128xf32>
    %cst_8 = arith.constant dense<0.000000e+00> : vector<8x128xf32>
    %9 = tpu.matmul %7, %8, %cst_8 {dimension_numbers = #tpu.dot_dimension_numbers<[1], [0], [0], [1], [0, 0, 1, 1], [], []>} : vector<8x128xf32>, vector<128x128xf32>, vector<8x128xf32> -> vector<8x128xf32>
    %c0_9 = arith.constant 0 : index
    %c0_10 = arith.constant 0 : index
    %10 = vector.load %arg5[%c0_9, %c0_10] : memref<1x128xf32, #tpu.memory_space<vmem>>, vector<1x128xf32>
    %11 = vector.broadcast %10 : vector<1x128xf32> to vector<8x128xf32>
    %12 = arith.addf %9, %11 : vector<8x128xf32>
    %cst_11 = arith.constant 0.000000e+00 : f32
    %13 = vector.broadcast %cst_11 : f32 to vector<8x128xf32>
    %14 = arith.maximumf %12, %13 : vector<8x128xf32>
    %c0_12 = arith.constant 0 : index
    %c0_13 = arith.constant 0 : index
    %15 = vector.load %arg6[%c0_12, %c0_13] : memref<128x128xf32, #tpu.memory_space<vmem>>, vector<128x128xf32>
    %cst_14 = arith.constant dense<0.000000e+00> : vector<8x128xf32>
    %16 = tpu.matmul %14, %15, %cst_14 {dimension_numbers = #tpu.dot_dimension_numbers<[1], [0], [0], [1], [0, 0, 1, 1], [], []>} : vector<8x128xf32>, vector<128x128xf32>, vector<8x128xf32> -> vector<8x128xf32>
    %c0_15 = arith.constant 0 : index
    %c0_16 = arith.constant 0 : index
    %17 = vector.load %arg7[%c0_15, %c0_16] : memref<1x128xf32, #tpu.memory_space<vmem>>, vector<1x128xf32>
    %18 = vector.broadcast %17 : vector<1x128xf32> to vector<8x128xf32>
    %19 = arith.addf %16, %18 : vector<8x128xf32>
    %cst_17 = arith.constant 0.000000e+00 : f32
    %20 = vector.broadcast %cst_17 : f32 to vector<8x128xf32>
    %21 = arith.maximumf %19, %20 : vector<8x128xf32>
    %c0_18 = arith.constant 0 : index
    %c0_19 = arith.constant 0 : index
    %22 = vector.load %arg8[%c0_18, %c0_19] : memref<8x128xf32, #tpu.memory_space<vmem>>, vector<8x128xf32>
    tpu.vector_store %arg8[%c0_18, %c0_19], %21 {strides = array<i32>} : memref<8x128xf32, #tpu.memory_space<vmem>>, vector<8x128xf32>,
    return
  }
  func.func @transform_0(%arg0: i32) -> (i32, i32) {
    %c0_i32 = arith.constant 0 : i32
    %c0_i32_0 = arith.constant 0 : i32
    return %arg0, %c0_i32 : i32, i32
  }
  func.func @transform_1(%arg0: i32) -> (i32, i32) {
    %c0_i32 = arith.constant 0 : i32
    %c0_i32_0 = arith.constant 0 : i32
    %c0_i32_1 = arith.constant 0 : i32
    return %c0_i32, %c0_i32_0 : i32, i32
  }
  func.func @transform_2(%arg0: i32) -> (i32, i32) {
    %c0_i32 = arith.constant 0 : i32
    %c0_i32_0 = arith.constant 0 : i32
    %c0_i32_1 = arith.constant 0 : i32
    return %c0_i32, %c0_i32_0 : i32, i32
  }
  func.func @transform_3(%arg0: i32) -> (i32, i32) {
    %c0_i32 = arith.constant 0 : i32
    %c0_i32_0 = arith.constant 0 : i32
    %c0_i32_1 = arith.constant 0 : i32
    return %c0_i32, %c0_i32_0 : i32, i32
  }
  func.func @transform_4(%arg0: i32) -> (i32, i32) {
    %c0_i32 = arith.constant 0 : i32
    %c0_i32_0 = arith.constant 0 : i32
    %c0_i32_1 = arith.constant 0 : i32
    return %c0_i32, %c0_i32_0 : i32, i32
  }
  func.func @transform_5(%arg0: i32) -> (i32, i32) {
    %c0_i32 = arith.constant 0 : i32
    %c0_i32_0 = arith.constant 0 : i32
    %c0_i32_1 = arith.constant 0 : i32
    return %c0_i32, %c0_i32_0 : i32, i32
  }
  func.func @transform_6(%arg0: i32) -> (i32, i32) {
    %c0_i32 = arith.constant 0 : i32
    %c0_i32_0 = arith.constant 0 : i32
    %c0_i32_1 = arith.constant 0 : i32
    return %c0_i32, %c0_i32_0 : i32, i32
  }
  func.func @transform_7(%arg0: i32) -> (i32, i32) {
    %c0_i32 = arith.constant 0 : i32
    %c0_i32_0 = arith.constant 0 : i32
    return %arg0, %c0_i32 : i32, i32
  }
}

</mosaic_0001>

<llo_original>
// kernel: tile.18
$region0: #{tile.18}
  #allocation0 [shape = 's32[1]{0}', space=sflag, size = 0x4, scoped, tag = 'scoped memory for tile.18']
  %s0 = inlined_call_operand.vmem [shape: f32[32], index: 0, kind: input, shape index: {}]
  %s1 = inlined_call_operand.vmem [shape: f32[4,32], index: 1, kind: output, shape index: {}]
  // Predicated region
  $region2: #{tile.18} parent=0 // pred_check
    _
  $region3: #{tile.18} parent=0 // pred_check_branch
    %3 = sbr.rel (0) target = $region5
  $region4: #{tile.18} parent=0 // pred_region
    _
  $region5: #{tile.18} parent=0 // pred_fallthru
    _
  %v4 = vld [vmem:[%s0] ss:$0 sm:$0xff]
  %5 = vst [vmem:[%s1] sm:$0xf] %v4

// kernel: tile.19
$region0: #{tile.19}
  %s0 = inlined_call_operand.vmem [shape: f32[4,32], index: 0, kind: input, shape index: {}]
  %s1 = inlined_call_operand.vmem [shape: f32[1,128], index: 1, kind: output, shape index: {}]
  $region1: #{tile.19} parent=0
    #allocation0 [shape = 'u8[4096]{0}', space=vmem, size = 0x1000, scoped, tag = 'scoped mem for output reshape']
    #allocation1 [shape = 'u8[4096]{0}', space=vmem, size = 0x1000, scoped, tag = 'scoped mem for input reshape']
    %s3 = sshllo.u32 0, 4
    %v4 = vld [vmem:[%s0] sm:%s3]
    %5 = vst [vmem:[#allocation1] sm:%s3] %v4
    %v6 = vld [vmem:[#allocation1] sm:$0x1]
    %vm7 = vcmask 261120
    %8 = vst.msk [vmem:[#allocation0] sm:$0x1] %vm7, %v6
    %s9 = scalar_lea.vmem [#allocation1], 3
    %v10 = vld [vmem:[%s9] sm:$0x1]
    %11 = vrot.lane.b32.xlu0 %v10, 96
    %v12 = vpop.permute.xlu0 %11
    %vm13 = vcmask 1048320
    %14 = vst.msk [vmem:[#allocation0] sm:$0x1] %vm13, %v12
    %s15 = scalar_lea.vmem [#allocation1], 2
    %v16 = vld [vmem:[%s15] sm:$0x1]
    %17 = vrot.lane.b32.xlu0 %v16, 64
    %v18 = vpop.permute.xlu0 %17
    %vm19 = vcmask 785920
    %20 = vst.msk [vmem:[#allocation0] sm:$0x1] %vm19, %v18
    %s21 = scalar_lea.vmem [#allocation1], 1
    %v22 = vld [vmem:[%s21] sm:$0x1]
    %23 = vrot.lane.b32.xlu0 %v22, 32
    %v24 = vpop.permute.xlu0 %23
    %vm25 = vcmask 523520
    %26 = vst.msk [vmem:[#allocation0] sm:$0x1] %vm25, %v24
    %s28 = sshllo.u32 0, 1
    %v30 = vld [vmem:[#allocation0] sm:%s28]
    %s31 = sshllo.u32 0, 1
    %32 = vst [vmem:[%s1] sm:%s31] %v30

// kernel: continuous_attribute_forward.1
$region0: #{continuous_attribute_forward.1}
  #allocation0 [shape = 'u32[]', space=smem, size = 0x4, offset = 0x4, fixed_abs, tag = 'smem constant byte address 0x4 - core index']
  #allocation1 [shape = 'u32[144,128]{1,0:T(1,128)}', space=vmem, size = 0x12000, scoped, tag = 'internal scratch']
  %s0 = inlined_call_operand.vmem [shape: f32[8,4], index: 0, kind: input, shape index: {}]
  %s1 = inlined_call_operand.vmem [shape: f32[4,128], index: 1, kind: input, shape index: {}]
  %s2 = inlined_call_operand.vmem [shape: f32[1,128], index: 2, kind: input, shape index: {}]
  %s3 = inlined_call_operand.vmem [shape: f32[128,128], index: 3, kind: input, shape index: {}]
  %s4 = inlined_call_operand.vmem [shape: f32[1,128], index: 4, kind: input, shape index: {}]
  %s5 = inlined_call_operand.vmem [shape: f32[128,128], index: 5, kind: input, shape index: {}]
  %s6 = inlined_call_operand.vmem [shape: f32[1,128], index: 6, kind: input, shape index: {}]
  %s7 = inlined_call_operand.vmem [shape: f32[8,128], index: 7, kind: output, shape index: {}]
  %s8 = sld [smem:[#allocation0]]
  $region38: #{continuous_attribute_forward.1} parent=0
    _
  %s10 = ssub.s32 1, %s8
  %s11 = scalar_select 0, %s10, %s8
  // Predicated region
  $region2: #{continuous_attribute_forward.1} parent=0 // pred_check
    _
  $region3: #{continuous_attribute_forward.1} parent=0 // pred_check_branch
    %13 = sbr.rel (0) target = $region5
  $region4: #{continuous_attribute_forward.1} parent=0 // pred_region
    _
  $region5: #{continuous_attribute_forward.1} parent=0 // pred_fallthru
    _
  // Predicated region
  $region6: #{continuous_attribute_forward.1} parent=0 // pred_check
    _
  $region7: #{continuous_attribute_forward.1} parent=0 // pred_check_branch
    %15 = sbr.rel (0) target = $region9
  $region8: #{continuous_attribute_forward.1} parent=0 // pred_region
    _
  $region9: #{continuous_attribute_forward.1} parent=0 // pred_fallthru
    _
  // Predicated region
  $region10: #{continuous_attribute_forward.1} parent=0 // pred_check
    _
  $region11: #{continuous_attribute_forward.1} parent=0 // pred_check_branch
    %17 = sbr.rel (0) target = $region13
  $region12: #{continuous_attribute_forward.1} parent=0 // pred_region
    _
  $region13: #{continuous_attribute_forward.1} parent=0 // pred_fallthru
    _
  // Predicated region
  $region14: #{continuous_attribute_forward.1} parent=0 // pred_check
    _
  $region15: #{continuous_attribute_forward.1} parent=0 // pred_check_branch
    %19 = sbr.rel (0) target = $region17
  $region16: #{continuous_attribute_forward.1} parent=0 // pred_region
    _
  $region17: #{continuous_attribute_forward.1} parent=0 // pred_fallthru
    _
  // Predicated region
  $region18: #{continuous_attribute_forward.1} parent=0 // pred_check
    _
  $region19: #{continuous_attribute_forward.1} parent=0 // pred_check_branch
    %21 = sbr.rel (0) target = $region21
  $region20: #{continuous_attribute_forward.1} parent=0 // pred_region
    _
  $region21: #{continuous_attribute_forward.1} parent=0 // pred_fallthru
    _
  // Predicated region
  $region22: #{continuous_attribute_forward.1} parent=0 // pred_check
    _
  $region23: #{continuous_attribute_forward.1} parent=0 // pred_check_branch
    %23 = sbr.rel (0) target = $region25
  $region24: #{continuous_attribute_forward.1} parent=0 // pred_region
    _
  $region25: #{continuous_attribute_forward.1} parent=0 // pred_fallthru
    _
  // Predicated region
  $region26: #{continuous_attribute_forward.1} parent=0 // pred_check
    _
  $region27: #{continuous_attribute_forward.1} parent=0 // pred_check_branch
    %25 = sbr.rel (0) target = $region29
  $region28: #{continuous_attribute_forward.1} parent=0 // pred_region
    _
  $region29: #{continuous_attribute_forward.1} parent=0 // pred_fallthru
    _
  %v26 = vld [vmem:[%s0] sm:$0xff]
  %v27 = vld [vmem:[%s1] sm:$0xf]
  %v28 = vld [vmem:[%s2] sm:$0x1]
  %v30 = vlaneseq
  %v31 = vshrl.u32 %v30, 7
  %v32 = vsub.s32 0, %v31
  %v33 = vrot.slane %v28, %v32
  %vm35 = vcmask 31744
  %v37 = vsel %vm35, %v26, 0
  %vm39 = vcmask 1043456
  %v41 = vsel %vm39, %v27, 0
  %43 = vmatprep.subr.mxu0 0.0
  %44 = vmatpush1.msra.mxu0 %v41
  %45 = vmatprep.subr.mxu0 0.0
  %46 = vmatpush1.msra.mxu0 0.0
  %47 = vmatprep.subr.mxu0 0.0
  %48 = vmatpush1.msra.mxu0 0.0
  %49 = vmatprep.subr.mxu0 0.0
  %50 = vmatpush1.msra.mxu0 0.0
  %51 = vmatprep.subr.mxu0 0.0
  %52 = vmatpush1.msra.mxu0 0.0
  %53 = vmatprep.subr.mxu0 0.0
  %54 = vmatpush1.msra.mxu0 0.0
  %55 = vmatprep.subr.mxu0 0.0
  %56 = vmatpush1.msra.mxu0 0.0
  %57 = vmatprep.subr.mxu0 0.0
  %58 = vmatpush1.msra.mxu0 0.0
  %59 = vmatprep.subr.mxu0 0.0
  %60 = vmatpush1.msra.mxu0 0.0
  %61 = vmatprep.subr.mxu0 0.0
  %62 = vmatpush1.msra.mxu0 0.0
  %63 = vmatprep.subr.mxu0 0.0
  %64 = vmatpush1.msra.mxu0 0.0
  %65 = vmatprep.subr.mxu0 0.0
  %66 = vmatpush1.msra.mxu0 0.0
  %67 = vmatprep.subr.mxu0 0.0
  %68 = vmatpush1.msra.mxu0 0.0
  %69 = vmatprep.subr.mxu0 0.0
  %70 = vmatpush1.msra.mxu0 0.0
  %71 = vmatprep.subr.mxu0 0.0
  %72 = vmatpush1.msra.mxu0 0.0
  %73 = vmatprep.subr.mxu0 0.0
  %74 = vmatpush1.msra.mxu0 0.0
  %75 = vmatprep.subr.mxu0 0.0
  %76 = vmatpush1.msra.mxu0 0.0
  %77 = vmatprep.subr.mxu0 0.0
  %78 = vmatpush1.msra.mxu0 0.0
  %79 = vmatprep.subr.mxu0 0.0
  %80 = vmatpush1.msra.mxu0 0.0
  %81 = vmatprep.subr.mxu0 0.0
  %82 = vmatpush1.msra.mxu0 0.0
  %83 = vmatprep.subr.mxu0 0.0
  %84 = vmatpush1.msra.mxu0 0.0
  %85 = vmatprep.subr.mxu0 0.0
  %86 = vmatpush1.msra.mxu0 0.0
  %87 = vmatprep.subr.mxu0 0.0
  %88 = vmatpush1.msra.mxu0 0.0
  %89 = vmatprep.subr.mxu0 0.0
  %90 = vmatpush1.msra.mxu0 0.0
  %91 = vmatprep.subr.mxu0 0.0
  %92 = vmatpush1.msra.mxu0 0.0
  %93 = vmatprep.subr.mxu0 0.0
  %94 = vmatpush1.msra.mxu0 0.0
  %95 = vmatprep.subr.mxu0 0.0
  %96 = vmatpush1.msra.mxu0 0.0
  %97 = vmatprep.subr.mxu0 0.0
  %98 = vmatpush1.msra.mxu0 0.0
  %99 = vmatprep.subr.mxu0 0.0
  %100 = vmatpush1.msra.mxu0 0.0
  %101 = vmatprep.subr.mxu0 0.0
  %102 = vmatpush1.msra.mxu0 0.0
  %103 = vmatprep.subr.mxu0 0.0
  %104 = vmatpush1.msra.mxu0 0.0
  %105 = vmatprep.subr.mxu0 0.0
  %106 = vmatpush1.msra.mxu0 0.0
  %107 = vmatprep.mubr.f32.mxu0 0.0
  %108 = vmatmul.mubr.f32.gmra.mrb[0].mxu0 %v37
  %v109 = vpop.f32.mrb[0].mxu0
  %v110 = vadd.f32 %v33, %v109
  %v111 = vpop.f32.mrb[0].mxu0
  %112 = vdwg.mxu0
  %v113 = vmax.f32 %v110, 0.0
  %v114 = vld [vmem:[%s3] sm:$0xff]
  %v115 = vld [vmem:[%s3 + $0x8] sm:$0xff]
  %v116 = vld [vmem:[%s3 + $0x10] sm:$0xff]
  %v117 = vld [vmem:[%s3 + $0x18] sm:$0xff]
  %v118 = vld [vmem:[%s3 + $0x20] sm:$0xff]
  %v119 = vld [vmem:[%s3 + $0x28] sm:$0xff]
  %v120 = vld [vmem:[%s3 + $0x30] sm:$0xff]
  %v121 = vld [vmem:[%s3 + $0x38] sm:$0xff]
  %v122 = vld [vmem:[%s3 + $0x40] sm:$0xff]
  %v123 = vld [vmem:[%s3 + $0x48] sm:$0xff]
  %v124 = vld [vmem:[%s3 + $0x50] sm:$0xff]
  %v125 = vld [vmem:[%s3 + $0x58] sm:$0xff]
  %v126 = vld [vmem:[%s3 + $0x60] sm:$0xff]
  %v127 = vld [vmem:[%s3 + $0x68] sm:$0xff]
  %v128 = vld [vmem:[%s3 + $0x70] sm:$0xff]
  %v129 = vld [vmem:[%s3 + $0x78] sm:$0xff]
  %v130 = vld [vmem:[%s4] sm:$0x1]
  %v132 = vlaneseq
  %v133 = vshrl.u32 %v132, 7
  %v134 = vsub.s32 0, %v133
  %v135 = vrot.slane %v130, %v134
  %137 = vmatprep.subr.mxu0 0.0
  %138 = vmatpush1.msra.mxu0 %v114
  %139 = vmatprep.subr.mxu0 0.0
  %140 = vmatpush1.msra.mxu0 %v115
  %141 = vmatprep.subr.mxu0 0.0
  %142 = vmatpush1.msra.mxu0 %v116
  %143 = vmatprep.subr.mxu0 0.0
  %144 = vmatpush1.msra.mxu0 %v117
  %145 = vmatprep.subr.mxu0 0.0
  %146 = vmatpush1.msra.mxu0 %v118
  %147 = vmatprep.subr.mxu0 0.0
  %148 = vmatpush1.msra.mxu0 %v119
  %149 = vmatprep.subr.mxu0 0.0
  %150 = vmatpush1.msra.mxu0 %v120
  %151 = vmatprep.subr.mxu0 0.0
  %152 = vmatpush1.msra.mxu0 %v121
  %153 = vmatprep.subr.mxu0 0.0
  %154 = vmatpush1.msra.mxu0 %v122
  %155 = vmatprep.subr.mxu0 0.0
  %156 = vmatpush1.msra.mxu0 %v123
  %157 = vmatprep.subr.mxu0 0.0
  %158 = vmatpush1.msra.mxu0 %v124
  %159 = vmatprep.subr.mxu0 0.0
  %160 = vmatpush1.msra.mxu0 %v125
  %161 = vmatprep.subr.mxu0 0.0
  %162 = vmatpush1.msra.mxu0 %v126
  %163 = vmatprep.subr.mxu0 0.0
  %164 = vmatpush1.msra.mxu0 %v127
  %165 = vmatprep.subr.mxu0 0.0
  %166 = vmatpush1.msra.mxu0 %v128
  %167 = vmatprep.subr.mxu0 0.0
  %168 = vmatpush1.msra.mxu0 %v129
  %169 = vmatprep.subr.mxu0 0.0
  %170 = vmatpush1.msra.mxu0 0.0
  %171 = vmatprep.subr.mxu0 0.0
  %172 = vmatpush1.msra.mxu0 0.0
  %173 = vmatprep.subr.mxu0 0.0
  %174 = vmatpush1.msra.mxu0 0.0
  %175 = vmatprep.subr.mxu0 0.0
  %176 = vmatpush1.msra.mxu0 0.0
  %177 = vmatprep.subr.mxu0 0.0
  %178 = vmatpush1.msra.mxu0 0.0
  %179 = vmatprep.subr.mxu0 0.0
  %180 = vmatpush1.msra.mxu0 0.0
  %181 = vmatprep.subr.mxu0 0.0
  %182 = vmatpush1.msra.mxu0 0.0
  %183 = vmatprep.subr.mxu0 0.0
  %184 = vmatpush1.msra.mxu0 0.0
  %185 = vmatprep.subr.mxu0 0.0
  %186 = vmatpush1.msra.mxu0 0.0
  %187 = vmatprep.subr.mxu0 0.0
  %188 = vmatpush1.msra.mxu0 0.0
  %189 = vmatprep.subr.mxu0 0.0
  %190 = vmatpush1.msra.mxu0 0.0
  %191 = vmatprep.subr.mxu0 0.0
  %192 = vmatpush1.msra.mxu0 0.0
  %193 = vmatprep.subr.mxu0 0.0
  %194 = vmatpush1.msra.mxu0 0.0
  %195 = vmatprep.subr.mxu0 0.0
  %196 = vmatpush1.msra.mxu0 0.0
  %197 = vmatprep.subr.mxu0 0.0
  %198 = vmatpush1.msra.mxu0 0.0
  %199 = vmatprep.subr.mxu0 0.0
  %200 = vmatpush1.msra.mxu0 0.0
  %201 = vmatprep.mubr.f32.mxu0 0.0
  %202 = vmatmul.mubr.f32.gmra.mrb[0].mxu0 %v113
  %v203 = vpop.f32.mrb[0].mxu0
  %v204 = vadd.f32 %v135, %v203
  %v205 = vpop.f32.mrb[0].mxu0
  %206 = vdwg.mxu0
  %v207 = vmax.f32 %v204, 0.0
  %v208 = vld [vmem:[%s5] sm:$0xff]
  %v209 = vld [vmem:[%s5 + $0x8] sm:$0xff]
  %v210 = vld [vmem:[%s5 + $0x10] sm:$0xff]
  %v211 = vld [vmem:[%s5 + $0x18] sm:$0xff]
  %v212 = vld [vmem:[%s5 + $0x20] sm:$0xff]
  %v213 = vld [vmem:[%s5 + $0x28] sm:$0xff]
  %v214 = vld [vmem:[%s5 + $0x30] sm:$0xff]
  %v215 = vld [vmem:[%s5 + $0x38] sm:$0xff]
  %v216 = vld [vmem:[%s5 + $0x40] sm:$0xff]
  %v217 = vld [vmem:[%s5 + $0x48] sm:$0xff]
  %v218 = vld [vmem:[%s5 + $0x50] sm:$0xff]
  %v219 = vld [vmem:[%s5 + $0x58] sm:$0xff]
  %v220 = vld [vmem:[%s5 + $0x60] sm:$0xff]
  %v221 = vld [vmem:[%s5 + $0x68] sm:$0xff]
  %v222 = vld [vmem:[%s5 + $0x70] sm:$0xff]
  %v223 = vld [vmem:[%s5 + $0x78] sm:$0xff]
  %v224 = vld [vmem:[%s6] sm:$0x1]
  %v226 = vlaneseq
  %v227 = vshrl.u32 %v226, 7
  %v228 = vsub.s32 0, %v227
  %v229 = vrot.slane %v224, %v228
  %231 = vmatprep.subr.mxu0 0.0
  %232 = vmatpush1.msra.mxu0 %v208
  %233 = vmatprep.subr.mxu0 0.0
  %234 = vmatpush1.msra.mxu0 %v209
  %235 = vmatprep.subr.mxu0 0.0
  %236 = vmatpush1.msra.mxu0 %v210
  %237 = vmatprep.subr.mxu0 0.0
  %238 = vmatpush1.msra.mxu0 %v211
  %239 = vmatprep.subr.mxu0 0.0
  %240 = vmatpush1.msra.mxu0 %v212
  %241 = vmatprep.subr.mxu0 0.0
  %242 = vmatpush1.msra.mxu0 %v213
  %243 = vmatprep.subr.mxu0 0.0
  %244 = vmatpush1.msra.mxu0 %v214
  %245 = vmatprep.subr.mxu0 0.0
  %246 = vmatpush1.msra.mxu0 %v215
  %247 = vmatprep.subr.mxu0 0.0
  %248 = vmatpush1.msra.mxu0 %v216
  %249 = vmatprep.subr.mxu0 0.0
  %250 = vmatpush1.msra.mxu0 %v217
  %251 = vmatprep.subr.mxu0 0.0
  %252 = vmatpush1.msra.mxu0 %v218
  %253 = vmatprep.subr.mxu0 0.0
  %254 = vmatpush1.msra.mxu0 %v219
  %255 = vmatprep.subr.mxu0 0.0
  %256 = vmatpush1.msra.mxu0 %v220
  %257 = vmatprep.subr.mxu0 0.0
  %258 = vmatpush1.msra.mxu0 %v221
  %259 = vmatprep.subr.mxu0 0.0
  %260 = vmatpush1.msra.mxu0 %v222
  %261 = vmatprep.subr.mxu0 0.0
  %262 = vmatpush1.msra.mxu0 %v223
  %263 = vmatprep.subr.mxu0 0.0
  %264 = vmatpush1.msra.mxu0 0.0
  %265 = vmatprep.subr.mxu0 0.0
  %266 = vmatpush1.msra.mxu0 0.0
  %267 = vmatprep.subr.mxu0 0.0
  %268 = vmatpush1.msra.mxu0 0.0
  %269 = vmatprep.subr.mxu0 0.0
  %270 = vmatpush1.msra.mxu0 0.0
  %271 = vmatprep.subr.mxu0 0.0
  %272 = vmatpush1.msra.mxu0 0.0
  %273 = vmatprep.subr.mxu0 0.0
  %274 = vmatpush1.msra.mxu0 0.0
  %275 = vmatprep.subr.mxu0 0.0
  %276 = vmatpush1.msra.mxu0 0.0
  %277 = vmatprep.subr.mxu0 0.0
  %278 = vmatpush1.msra.mxu0 0.0
  %279 = vmatprep.subr.mxu0 0.0
  %280 = vmatpush1.msra.mxu0 0.0
  %281 = vmatprep.subr.mxu0 0.0
  %282 = vmatpush1.msra.mxu0 0.0
  %283 = vmatprep.subr.mxu0 0.0
  %284 = vmatpush1.msra.mxu0 0.0
  %285 = vmatprep.subr.mxu0 0.0
  %286 = vmatpush1.msra.mxu0 0.0
  %287 = vmatprep.subr.mxu0 0.0
  %288 = vmatpush1.msra.mxu0 0.0
  %289 = vmatprep.subr.mxu0 0.0
  %290 = vmatpush1.msra.mxu0 0.0
  %291 = vmatprep.subr.mxu0 0.0
  %292 = vmatpush1.msra.mxu0 0.0
  %293 = vmatprep.subr.mxu0 0.0
  %294 = vmatpush1.msra.mxu0 0.0
  %295 = vmatprep.mubr.f32.mxu0 0.0
  %296 = vmatmul.mubr.f32.gmra.mrb[0].mxu0 %v207
  %v297 = vpop.f32.mrb[0].mxu0
  %v298 = vadd.f32 %v229, %v297
  %v299 = vpop.f32.mrb[0].mxu0
  %300 = vdwg.mxu0
  %v301 = vmax.f32 %v298, 0.0
  %302 = vst [vmem:[%s7] sm:$0xff] %v301
  // Predicated region
  $region30: #{continuous_attribute_forward.1} parent=0 // pred_check
    _
  $region31: #{continuous_attribute_forward.1} parent=0 // pred_check_branch
    %304 = sbr.rel (0) target = $region33
  $region32: #{continuous_attribute_forward.1} parent=0 // pred_region
    _
  $region33: #{continuous_attribute_forward.1} parent=0 // pred_fallthru
    _
  // Predicated region
  $region34: #{continuous_attribute_forward.1} parent=0 // pred_check
    _
  $region35: #{continuous_attribute_forward.1} parent=0 // pred_check_branch
    %306 = sbr.rel (0) target = $region37
  $region36: #{continuous_attribute_forward.1} parent=0 // pred_region
    _
  $region37: #{continuous_attribute_forward.1} parent=0 // pred_fallthru
    _

</llo_original>
